<compile_context>
chip_gen: v6e
topology: v6e:2x2x1
jax: 0.10.0
libtpu: 0.0.40
codegen_flags: <defaults>
</compile_context>

<pallas_src>
import functools
import math

import jax
import jax.numpy as jnp
from jax import lax
from jax.experimental import pallas as pl
from jax.experimental.pallas import tpu as pltpu

_INV_SQRT2 = 0.7071067811865476


def _gelu_exact(x):
    # PyTorch nn.GELU() default (approximate='none'): 0.5*x*(1+erf(x/sqrt(2)))
    return 0.5 * x * (1.0 + lax.erf(x * _INV_SQRT2))


def _round_up(a, b):
    return ((a + b - 1) // b) * b


@functools.lru_cache(maxsize=1)
def _chip_vmem_bytes():
    # One-time hardware probe, kept out of the per-call hot path.
    try:
        return int(pltpu.get_tpu_info().vmem_capacity_bytes)
    except Exception:
        return 64 * 1024 * 1024  # conservative: v7x per-TensorCore VMEM


def _pick_h_tile(H, target):
    """Largest multiple of 128 <= target that divides H, else H itself."""
    if H <= target:
        return H
    t = (target // 128) * 128
    while t >= 128:
        if H % t == 0:
            return t
        t -= 128
    return H


def _vmem_estimate(block_rows, h_blk, D, io_itemsize):
    xb = 2 * block_rows * D * io_itemsize      # x tile (double-buffered)
    ob = 2 * block_rows * D * io_itemsize      # out tile (double-buffered)
    w1b = 2 * D * h_blk * 2                    # bf16 weight tiles (2-buf)
    w2b = 2 * h_blk * D * 2
    bb = 2 * (h_blk + D) * 4                   # bias tiles
    acc = block_rows * D * 4                   # f32 accumulator scratch
    hid = block_rows * h_blk * 4               # f32 hidden intermediate
    return xb + ob + w1b + w2b + bb + acc + hid


def _select_tiles(M, D, H, io_itemsize):
    vmem_cap = _chip_vmem_bytes()
    if vmem_cap <= 72 * 1024 * 1024:
        # v7x: 64 MiB physical per TensorCore -> keep working set <= ~40 MiB.
        row_cap, h_target, budget, limit_cap = 384, 256, 40 << 20, 48 << 20
    else:
        # v5e / v6e: 128 MiB physical -> bigger tiles, limit cap ~96 MiB.
        row_cap, h_target, budget, limit_cap = 512, 512, 80 << 20, 96 << 20

    block_rows = min(_round_up(M, 8), row_cap)
    # Give the row grid >= 2 steps when there is enough work (v7x megacore).
    if M >= 256 and M <= block_rows:
        block_rows = max(128, _round_up(pl.cdiv(M, 2), 8))
    h_blk = _pick_h_tile(H, h_target)

    # Shrink tiles until the per-step working set fits the budget.
    while (_vmem_estimate(block_rows, h_blk, D, io_itemsize) > budget
           and (block_rows > 128 or h_blk > 128)):
        if h_blk > 128 and h_blk >= block_rows and H % (h_blk // 2) == 0:
            h_blk //= 2
        elif block_rows > 128:
            block_rows = max(128, _round_up(block_rows // 2, 8))
        elif h_blk > 128 and H % (h_blk // 2) == 0:
            h_blk //= 2
        else:
            break

    est = _vmem_estimate(block_rows, h_blk, D, io_itemsize)
    vmem_limit = min(max(int(est * 1.5), 32 << 20), limit_cap)
    return block_rows, h_blk, vmem_limit


def ffn_kernel(x_ref, w1_ref, b1_ref, w2_ref, b2_ref, o_ref, acc_ref):
    # Grid = (row tiles [parallel], hidden tiles [arbitrary, last]).
    # x_ref: (bm, D)       w1: (D, bh) bf16   b1: (1, bh) f32
    # w2: (bh, D) bf16     b2: (1, D) f32     o_ref: (bm, D)   acc: (bm, D) f32
    hk = pl.program_id(1)

    @pl.when(hk == 0)
    def _():
        acc_ref[...] = jnp.zeros_like(acc_ref)

    x = x_ref[...].astype(jnp.bfloat16)
    h = jnp.dot(x, w1_ref[...], preferred_element_type=jnp.float32)
    h = _gelu_exact(h + b1_ref[0].astype(jnp.float32))          # f32 elementwise
    acc_ref[...] += jnp.dot(h.astype(jnp.bfloat16), w2_ref[...],
                            preferred_element_type=jnp.float32)

    # TODO(synk): dropout is identity at p=0.0 (eval semantics); training-mode
    # dropout would use pltpu.prng_seed / pltpu.prng_random_bits masks.
    @pl.when(hk == pl.num_programs(1) - 1)
    def _():
        y = acc_ref[...] + b2_ref[0].astype(jnp.float32)
        o_ref[...] = y.astype(o_ref.dtype)


def feed_forward(x, params, *, block_rows=None, block_hidden=None):
    """Fused FeedForward forward pass.  x: (..., D)."""
    w1, b1, w2, b2 = params
    D = x.shape[-1]
    H = w1.shape[1]
    lead = x.shape[:-1]
    M = int(math.prod(lead)) if lead else 1
    x2 = x.reshape(M, D)

    auto_bm, auto_bh, vmem_limit = _select_tiles(M, D, H, x2.dtype.itemsize)
    bm = block_rows if block_rows is not None else auto_bm
    bh = block_hidden if block_hidden is not None else auto_bh
    if H % bh != 0:
        raise ValueError(f"block_hidden={bh} must divide hidden_dim={H}")

    # Ragged last row block is handled by Pallas store masking: no pad/slice.
    grid = (pl.cdiv(M, bm), H // bh)

    itemsz = lambda a: a.dtype.itemsize
    cost = pl.CostEstimate(
        flops=4 * M * D * H,                      # two matmuls, 2 flops/MAC
        transcendentals=M * H,                    # erf per hidden element
        bytes_accessed=(2 * M * D * itemsz(x2)
                        + w1.size * itemsz(w1) + w2.size * itemsz(w2)
                        + b1.size * itemsz(b1) + b2.size * itemsz(b2)))

    out2 = pl.pallas_call(
        ffn_kernel,
        out_shape=jax.ShapeDtypeStruct((M, D), x.dtype),
        grid_spec=pltpu.PrefetchScalarGridSpec(
            num_scalar_prefetch=0,
            grid=grid,
            in_specs=[
                pl.BlockSpec((bm, D), lambda i, k: (i, 0)),   # x row tile
                pl.BlockSpec((D, bh), lambda i, k: (0, k)),   # w1 H-chunk
                pl.BlockSpec((1, bh), lambda i, k: (0, k)),   # b1 H-chunk
                pl.BlockSpec((bh, D), lambda i, k: (k, 0)),   # w2 H-chunk
                pl.BlockSpec((1, D), lambda i, k: (0, 0)),    # b2
            ],
            out_specs=pl.BlockSpec((bm, D), lambda i, k: (i, 0)),
            scratch_shapes=[pltpu.VMEM((bm, D), jnp.float32)],
        ),
        compiler_params=pltpu.CompilerParams(
            dimension_semantics=("parallel", "arbitrary"),
            vmem_limit_bytes=vmem_limit),
        cost_estimate=cost,
    )(x2, w1, b1, w2, b2)

    return out2.reshape(*lead, D)


def init_params(key, dim, hidden_dim):
    # PyTorch nn.Linear default init: U(-1/sqrt(fan_in), 1/sqrt(fan_in)).
    k1, k2, k3, k4 = jax.random.split(key, 4)
    lim1 = 1.0 / math.sqrt(dim)
    lim2 = 1.0 / math.sqrt(hidden_dim)
    # Weights stored in bf16 (MXU-native operands, half the HBM/VMEM traffic).
    w1 = jax.random.uniform(k1, (dim, hidden_dim), jnp.float32,
                            -lim1, lim1).astype(jnp.bfloat16)
    b1 = jax.random.uniform(k2, (1, hidden_dim), jnp.float32, -lim1, lim1)
    w2 = jax.random.uniform(k3, (hidden_dim, dim), jnp.float32,
                            -lim2, lim2).astype(jnp.bfloat16)
    b2 = jax.random.uniform(k4, (1, dim), jnp.float32, -lim2, lim2)
    return w1, b1, w2, b2


def feed_forward_ref(x, params):
    # Pure-JAX reference with the same precision policy
    # (bf16 MXU operands, f32 accumulation, f32 elementwise), eval semantics.
    w1, b1, w2, b2 = params
    shp = x.shape
    x2 = x.reshape(-1, shp[-1])
    h = jnp.dot(x2.astype(jnp.bfloat16), w1, preferred_element_type=jnp.float32)
    h = _gelu_exact(h + b1[0].astype(jnp.float32))
    y = jnp.dot(h.astype(jnp.bfloat16), w2, preferred_element_type=jnp.float32)
    y = y + b2[0].astype(jnp.float32)
    return y.astype(x.dtype).reshape(shp)


if __name__ == "__main__":
    # Small, lane-dense shapes.  S=50 makes M=100 rows, so the last row block
    # is ragged and exercises the mask-on-store (no-pad) path.
    B, S, D, H = 2, 50, 128, 512

    key = jax.random.PRNGKey(0)
    kx, kp = jax.random.split(key)
    x = jax.random.normal(kx, (B, S, D), jnp.float32)
    params = init_params(kp, D, H)

    ref = feed_forward_ref(x, params)

    # Default (auto-tiled) path.
    out = jax.block_until_ready(feed_forward(x, params))
    assert out.shape == (B, S, D)
    assert jnp.allclose(out, ref, atol=2e-3, rtol=2e-3), float(
        jnp.max(jnp.abs(out - ref)))

    # Explicitly tiled path: 2 row tiles x 4 hidden tiles exercises the
    # accumulator init/finalize over the "arbitrary" H axis and the masked
    # ragged last row block.
    out2 = jax.block_until_ready(
        feed_forward(x, params, block_rows=64, block_hidden=128))
    assert jnp.allclose(out2, ref, atol=2e-3, rtol=2e-3), float(
        jnp.max(jnp.abs(out2 - ref)))

    print("KERNEL_OK")
</pallas_src>

<mosaic_0001>
module attributes {stable_mosaic.version = 11 : i64} {
  func.func @ffn_kernel(%arg0: i32, %arg1: i32, %arg2: memref<104x128xf32, #tpu.memory_space<vmem>>, %arg3: memref<128x256xbf16, #tpu.memory_space<vmem>>, %arg4: memref<1x256xf32, #tpu.memory_space<vmem>>, %arg5: memref<256x128xbf16, #tpu.memory_space<vmem>>, %arg6: memref<1x128xf32, #tpu.memory_space<vmem>>, %arg7: memref<104x128xf32, #tpu.memory_space<vmem>>, %arg8: memref<104x128xf32, #tpu.memory_space<vmem>>) attributes {dimension_semantics = [#tpu.dimension_semantics<parallel>, #tpu.dimension_semantics<arbitrary>], iteration_bounds = array<i64: 1, 2>, scalar_prefetch = 0 : i64, scratch_operands = 1 : i64, tpu.core_type = #tpu.core_type<tc>, window_params = [{transform_indices = @transform_0, window_bounds = array<i64: 104, 128>}, {transform_indices = @transform_1, window_bounds = array<i64: 128, 256>}, {transform_indices = @transform_2, window_bounds = array<i64: 1, 256>}, {transform_indices = @transform_3, window_bounds = array<i64: 256, 128>}, {pipeline_mode = #tpu.pipeline_mode<synchronous>, transform_indices = @transform_4, window_bounds = array<i64: 1, 128>}, {transform_indices = @transform_5, window_bounds = array<i64: 104, 128>}]} {
    %c0_i32 = arith.constant 0 : i32
    %0 = arith.cmpi eq, %arg1, %c0_i32 : i32
    %1 = arith.extui %0 : i1 to i32
    %c0_i32_0 = arith.constant 0 : i32
    %2 = arith.cmpi ne, %1, %c0_i32_0 : i32
    scf.if %2 {
      %cst_17 = arith.constant 0.000000e+00 : f32
      %29 = vector.broadcast %cst_17 : f32 to vector<104x128xf32>
      %c0_18 = arith.constant 0 : index
      %c0_19 = arith.constant 0 : index
      %30 = vector.load %arg8[%c0_18, %c0_19] : memref<104x128xf32, #tpu.memory_space<vmem>>, vector<104x128xf32>
      tpu.vector_store %arg8[%c0_18, %c0_19], %29 {strides = array<i32>} : memref<104x128xf32, #tpu.memory_space<vmem>>, vector<104x128xf32>,
    } else {
    }
    %c0 = arith.constant 0 : index
    %c0_1 = arith.constant 0 : index
    %3 = vector.load %arg2[%c0, %c0_1] : memref<104x128xf32, #tpu.memory_space<vmem>>, vector<104x128xf32>
    %4 = arith.truncf %3 : vector<104x128xf32> to vector<104x128xbf16>
    %c0_2 = arith.constant 0 : index
    %c0_3 = arith.constant 0 : index
    %5 = vector.load %arg3[%c0_2, %c0_3] : memref<128x256xbf16, #tpu.memory_space<vmem>>, vector<128x256xbf16>
    %cst = arith.constant dense<0.000000e+00> : vector<104x256xf32>
    %6 = tpu.matmul %4, %5, %cst {dimension_numbers = #tpu.dot_dimension_numbers<[1], [0], [0], [1], [0, 0, 1, 1], [], []>} : vector<104x128xbf16>, vector<128x256xbf16>, vector<104x256xf32> -> vector<104x256xf32>
    %c0_4 = arith.constant 0 : index
    %c0_5 = arith.constant 0 : index
    %7 = vector.load %arg4[%c0_4, %c0_5] : memref<1x256xf32, #tpu.memory_space<vmem>>, vector<1x256xf32>
    %8 = vector.shape_cast %7 : vector<1x256xf32> to vector<256xf32>
    %9 = vector.shape_cast %8 : vector<256xf32> to vector<1x256xf32>
    %10 = vector.broadcast %9 : vector<1x256xf32> to vector<104x256xf32>
    %11 = arith.addf %6, %10 : vector<104x256xf32>
    %cst_6 = arith.constant 5.000000e-01 : f32
    %12 = vector.broadcast %cst_6 : f32 to vector<104x256xf32>
    %13 = arith.mulf %12, %11 : vector<104x256xf32>
    %cst_7 = arith.constant 0.707106769 : f32
    %14 = vector.broadcast %cst_7 : f32 to vector<104x256xf32>
    %15 = arith.mulf %11, %14 : vector<104x256xf32>
    %16 = math.erf %15 : vector<104x256xf32>
    %cst_8 = arith.constant 1.000000e+00 : f32
    %17 = vector.broadcast %cst_8 : f32 to vector<104x256xf32>
    %18 = arith.addf %17, %16 : vector<104x256xf32>
    %19 = arith.mulf %13, %18 : vector<104x256xf32>
    %c0_9 = arith.constant 0 : index
    %c0_10 = arith.constant 0 : index
    %20 = vector.load %arg8[%c0_9, %c0_10] : memref<104x128xf32, #tpu.memory_space<vmem>>, vector<104x128xf32>
    %21 = arith.truncf %19 : vector<104x256xf32> to vector<104x256xbf16>
    %c0_11 = arith.constant 0 : index
    %c0_12 = arith.constant 0 : index
    %22 = vector.load %arg5[%c0_11, %c0_12] : memref<256x128xbf16, #tpu.memory_space<vmem>>, vector<256x128xbf16>
    %cst_13 = arith.constant dense<0.000000e+00> : vector<104x128xf32>
    %23 = tpu.matmul %21, %22, %cst_13 {dimension_numbers = #tpu.dot_dimension_numbers<[1], [0], [0], [1], [0, 0, 1, 1], [], []>} : vector<104x256xbf16>, vector<256x128xbf16>, vector<104x128xf32> -> vector<104x128xf32>
    %24 = arith.addf %20, %23 : vector<104x128xf32>
    %c0_14 = arith.constant 0 : index
    %c0_15 = arith.constant 0 : index
    %25 = vector.load %arg8[%c0_14, %c0_15] : memref<104x128xf32, #tpu.memory_space<vmem>>, vector<104x128xf32>
    tpu.vector_store %arg8[%c0_14, %c0_15], %24 {strides = array<i32>} : memref<104x128xf32, #tpu.memory_space<vmem>>, vector<104x128xf32>,
    %c1_i32 = arith.constant 1 : i32
    %26 = arith.cmpi eq, %arg1, %c1_i32 : i32
    %27 = arith.extui %26 : i1 to i32
    %c0_i32_16 = arith.constant 0 : i32
    %28 = arith.cmpi ne, %27, %c0_i32_16 : i32
    scf.if %28 {
      %c0_17 = arith.constant 0 : index
      %c0_18 = arith.constant 0 : index
      %29 = vector.load %arg8[%c0_17, %c0_18] : memref<104x128xf32, #tpu.memory_space<vmem>>, vector<104x128xf32>
      %c0_19 = arith.constant 0 : index
      %c0_20 = arith.constant 0 : index
      %30 = vector.load %arg6[%c0_19, %c0_20] : memref<1x128xf32, #tpu.memory_space<vmem>>, vector<1x128xf32>
      %31 = vector.shape_cast %30 : vector<1x128xf32> to vector<128xf32>
      %32 = vector.shape_cast %31 : vector<128xf32> to vector<1x128xf32>
      %33 = vector.broadcast %32 : vector<1x128xf32> to vector<104x128xf32>
      %34 = arith.addf %29, %33 : vector<104x128xf32>
      %c0_21 = arith.constant 0 : index
      %c0_22 = arith.constant 0 : index
      %35 = vector.load %arg7[%c0_21, %c0_22] : memref<104x128xf32, #tpu.memory_space<vmem>>, vector<104x128xf32>
      tpu.vector_store %arg7[%c0_21, %c0_22], %34 {strides = array<i32>} : memref<104x128xf32, #tpu.memory_space<vmem>>, vector<104x128xf32>,
    } else {
    }
    return
  }
  func.func @transform_0(%arg0: i32, %arg1: i32) -> (i32, i32) {
    %c0_i32 = arith.constant 0 : i32
    %c0_i32_0 = arith.constant 0 : i32
    return %arg0, %c0_i32 : i32, i32
  }
  func.func @transform_1(%arg0: i32, %arg1: i32) -> (i32, i32) {
    %c0_i32 = arith.constant 0 : i32
    %c0_i32_0 = arith.constant 0 : i32
    return %c0_i32, %arg1 : i32, i32
  }
  func.func @transform_2(%arg0: i32, %arg1: i32) -> (i32, i32) {
    %c0_i32 = arith.constant 0 : i32
    %c0_i32_0 = arith.constant 0 : i32
    return %c0_i32, %arg1 : i32, i32
  }
  func.func @transform_3(%arg0: i32, %arg1: i32) -> (i32, i32) {
    %c0_i32 = arith.constant 0 : i32
    %c0_i32_0 = arith.constant 0 : i32
    return %arg1, %c0_i32 : i32, i32
  }
  func.func @transform_4(%arg0: i32, %arg1: i32) -> (i32, i32) {
    %c0_i32 = arith.constant 0 : i32
    %c0_i32_0 = arith.constant 0 : i32
    %c0_i32_1 = arith.constant 0 : i32
    return %c0_i32, %c0_i32_0 : i32, i32
  }
  func.func @transform_5(%arg0: i32, %arg1: i32) -> (i32, i32) {
    %c0_i32 = arith.constant 0 : i32
    %c0_i32_0 = arith.constant 0 : i32
    return %arg0, %c0_i32 : i32, i32
  }
}

</mosaic_0001>

<llo_original>
// kernel: tpu_custom_call.1
$region0: #{tpu_custom_call.1}
  #allocation0 [shape = 'u32[]', space=smem, size = 0x4, offset = 0x4, fixed_abs, tag = 'smem constant byte address 0x4 - core index']
  #allocation1 [shape = 'u32[144,128]{1,0:T(1,128)}', space=vmem, size = 0x12000, scoped, tag = 'internal scratch']
  #allocation2 [shape = 'f32[104,128]{1,0:T(8,128)}', space=vmem, size = 0xd000, scoped, tag = 'scratch operand']
  %s0 = inlined_call_operand.hbm [shape: f32[100,128], index: 0, kind: input, shape index: {}]
  %s1 = inlined_call_operand.hbm [shape: bf16[128,512], index: 1, kind: input, shape index: {}]
  %s2 = inlined_call_operand.hbm [shape: f32[1,512], index: 2, kind: input, shape index: {}]
  %s3 = inlined_call_operand.hbm [shape: bf16[512,128], index: 3, kind: input, shape index: {}]
  %s4 = inlined_call_operand.vmem [shape: f32[1,128], index: 4, kind: input, shape index: {}]
  %s5 = inlined_call_operand.hbm [shape: f32[100,128], index: 5, kind: output, shape index: {}]
  %s6 = sld [smem:[#allocation0]]
  $region77: #{tpu_custom_call.1} parent=0
    _
  %s8 = ssub.s32 1, %s6
  %s9 = scalar_select 0, %s8, %s6
  $region1: #{tpu_custom_call.1} parent=0
    #allocation3 [shape = 'u8[53248]{0}', space=vmem, size = 0xd000, scoped, tag = 'input window, operand 0, single buffered']
    #allocation4 [shape = 's32[2]{0}', space=sflag, size = 0x8, scoped, tag = 'scoped memory for tpu_custom_call.1']
    #allocation5 [shape = 's32[2]{0}', space=sflag, size = 0x8, scoped, tag = 'scoped memory for tpu_custom_call.1']
    #allocation6 [shape = 'u8[131072]{0}', space=vmem, size = 0x20000, scoped, tag = 'input window, operand 1']
    #allocation7 [shape = 's32[2]{0}', space=sflag, size = 0x8, scoped, tag = 'scoped memory for tpu_custom_call.1']
    #allocation8 [shape = 'u8[2048]{0}', space=vmem, size = 0x800, scoped, tag = 'input window, operand 2']
    #allocation9 [shape = 'u8[131072]{0}', space=vmem, size = 0x20000, scoped, tag = 'input window, operand 3']
    #allocation10 [shape = 's32[2]{0}', space=sflag, size = 0x8, scoped, tag = 'scoped memory for tpu_custom_call.1']
    #allocation11 [shape = 'u8[53248]{0}', space=vmem, size = 0xd000, scoped, tag = 'output window, operand 0, single buffered']
    %10 = vsyncpa [#allocation4], 0
    %11 = vsyncpa [#allocation7], 0
    %s12 = scalar_lea.sflag [#allocation7], 1
    %13 = vsyncpa %s12, 0
    %14 = vsyncpa [#allocation10], 0
    %s15 = scalar_lea.sflag [#allocation10], 1
    %16 = vsyncpa %s15, 0
    %17 = vsyncpa [#allocation5], 0
    loop: start=0, step=1, limit=4
    $region2: #{tpu_custom_call.1} parent=1 // loop_pre_header
      _
    $region3: #{tpu_custom_call.1} parent=1 // loop_header
      %s19 = sphi 0, %s23
      %p20 = scmp.ge.s32.totalorder %s19, 4
      %s26 = sphi 0, %s38
      %s27 = sphi 0, %s34
      %s28 = sphi 0, %s26
      %s29 = sphi 0, %s27
      %s30 = sphi 0, %s28
      %s31 = sphi 0, %s29
      %s41 = sphi 0, %s43
      %s44 = sphi 0, %s41
      %s45 = sphi 0, %s44
      %s61 = sphi 0, %s45
      %s67 = sphi 0, %s69
      %s70 = sphi 0, %s67
      %s71 = sphi 0, %s70
      %s87 = sphi 0, %s71
      %s93 = sphi 0, %s95
      %s96 = sphi 0, %s93
      %s97 = sphi 0, %s96
      %s113 = sphi 0, %s97
      %s119 = sphi 0, %s121
      %s122 = sphi 0, %s119
      %s123 = sphi 0, %s122
      %s139 = sphi 0, %s123
      %s143 = sphi 0, %s143
      %s145 = sphi 0, %s143
      %s146 = sphi 0, %s145
      %s160 = sphi 0, %s146
      %s166 = sphi 0, %s168
      %s169 = sphi 0, %s166
      %s170 = sphi 0, %s169
      %s186 = sphi 0, %s170
    $region4: #{tpu_custom_call.1} parent=1 // loop_header_branch
      %22 = sbr.rel (%p20) target = $region8
    $region5: #{tpu_custom_call.1} parent=1 // loop_body
      %s24 = ssub.s32 %s19, 1
      %s25 = ssub.s32 %s19, 2
      %s32 = sadd.s32 1, %s27
      %p33 = scmp.ge.s32.totalorder %s32, 2
      %s34 = scalar_select %p33, 0, %s32
      %s35 = sadd.s32 1, %s26
      %s36 = scalar_select %p33, %s35, %s26
      %p37 = scmp.ge.s32.totalorder %s36, 1
      %s38 = scalar_select %p37, 0, %s36
      %s39 = ssub.s32 %s26, %s38
      %p40 = scmp.eq.s32.totalorder %s39, 0
      %s42 = sadd.s32 %s41, 1
      %s43 = scalar_select %p40, %s41, %s42
      %p46 = pneg %p40
      %p47 = scmp.eq.s32.totalorder %s19, 1
      %p48 = por %p46, %p47
      %p49 = scmp.ne.s32.totalorder %s41, %s44
      %p50 = scmp.eq.s32.totalorder %s19, 0
      %p51 = por %p49, %p50
      %p52 = scmp.ne.s32.totalorder %s41, %s44
      %p53 = scmp.eq.s32.totalorder %s24, 1
      %p54 = por %p52, %p53
      %p55 = scmp.ne.s32.totalorder %s44, %s45
      %p56 = scmp.eq.s32.totalorder %s24, 0
      %p57 = por %p55, %p56
      %p58 = scmp.ne.s32.totalorder %s44, %s45
      %p59 = scmp.eq.s32.totalorder %s25, 1
      %p60 = por %p58, %p59
      %p62 = scmp.ne.s32.totalorder %s45, %s61
      %p63 = scmp.eq.s32.totalorder %s25, 0
      %p64 = por %p62, %p63
      %s65 = ssub.s32 %s27, %s34
      %p66 = scmp.eq.s32.totalorder %s65, 0
      %s68 = sadd.s32 %s67, 1
      %s69 = scalar_select %p66, %s67, %s68
      %p72 = pneg %p66
      %p73 = scmp.eq.s32.totalorder %s19, 1
      %p74 = por %p72, %p73
      %p75 = scmp.ne.s32.totalorder %s67, %s70
      %p76 = scmp.eq.s32.totalorder %s19, 0
      %p77 = por %p75, %p76
      %p78 = scmp.ne.s32.totalorder %s67, %s70
      %p79 = scmp.eq.s32.totalorder %s24, 1
      %p80 = por %p78, %p79
      %p81 = scmp.ne.s32.totalorder %s70, %s71
      %p82 = scmp.eq.s32.totalorder %s24, 0
      %p83 = por %p81, %p82
      %p84 = scmp.ne.s32.totalorder %s70, %s71
      %p85 = scmp.eq.s32.totalorder %s25, 1
      %p86 = por %p84, %p85
      %p88 = scmp.ne.s32.totalorder %s71, %s87
      %p89 = scmp.eq.s32.totalorder %s25, 0
      %p90 = por %p88, %p89
      %s91 = ssub.s32 %s27, %s34
      %p92 = scmp.eq.s32.totalorder %s91, 0
      %s94 = sadd.s32 %s93, 1
      %s95 = scalar_select %p92, %s93, %s94
      %p98 = pneg %p92
      %p99 = scmp.eq.s32.totalorder %s19, 1
      %p100 = por %p98, %p99
      %p101 = scmp.ne.s32.totalorder %s93, %s96
      %p102 = scmp.eq.s32.totalorder %s19, 0
      %p103 = por %p101, %p102
      %p104 = scmp.ne.s32.totalorder %s93, %s96
      %p105 = scmp.eq.s32.totalorder %s24, 1
      %p106 = por %p104, %p105
      %p107 = scmp.ne.s32.totalorder %s96, %s97
      %p108 = scmp.eq.s32.totalorder %s24, 0
      %p109 = por %p107, %p108
      %p110 = scmp.ne.s32.totalorder %s96, %s97
      %p111 = scmp.eq.s32.totalorder %s25, 1
      %p112 = por %p110, %p111
      %p114 = scmp.ne.s32.totalorder %s97, %s113
      %p115 = scmp.eq.s32.totalorder %s25, 0
      %p116 = por %p114, %p115
      %s117 = ssub.s32 %s27, %s34
      %p118 = scmp.eq.s32.totalorder %s117, 0
      %s120 = sadd.s32 %s119, 1
      %s121 = scalar_select %p118, %s119, %s120
      %p124 = pneg %p118
      %p125 = scmp.eq.s32.totalorder %s19, 1
      %p126 = por %p124, %p125
      %p127 = scmp.ne.s32.totalorder %s119, %s122
      %p128 = scmp.eq.s32.totalorder %s19, 0
      %p129 = por %p127, %p128
      %p130 = scmp.ne.s32.totalorder %s119, %s122
      %p131 = scmp.eq.s32.totalorder %s24, 1
      %p132 = por %p130, %p131
      %p133 = scmp.ne.s32.totalorder %s122, %s123
      %p134 = scmp.eq.s32.totalorder %s24, 0
      %p135 = por %p133, %p134
      %p136 = scmp.ne.s32.totalorder %s122, %s123
      %p137 = scmp.eq.s32.totalorder %s25, 1
      %p138 = por %p136, %p137
      %p140 = scmp.ne.s32.totalorder %s123, %s139
      %p141 = scmp.eq.s32.totalorder %s25, 0
      %p142 = por %p140, %p141
      %s144 = sadd.s32 %s143, 1
      %p147 = scmp.eq.s32.totalorder %s19, 1
      %p148 = scmp.ne.s32.totalorder %s143, %s145
      %p149 = scmp.eq.s32.totalorder %s19, 0
      %p150 = por %p148, %p149
      %p151 = scmp.ne.s32.totalorder %s143, %s145
      %p152 = scmp.eq.s32.totalorder %s24, 1
      %p153 = por %p151, %p152
      %p154 = scmp.ne.s32.totalorder %s145, %s146
      %p155 = scmp.eq.s32.totalorder %s24, 0
      %p156 = por %p154, %p155
      %p157 = scmp.ne.s32.totalorder %s145, %s146
      %p158 = scmp.eq.s32.totalorder %s25, 1
      %p159 = por %p157, %p158
      %p161 = scmp.ne.s32.totalorder %s146, %s160
      %p162 = scmp.eq.s32.totalorder %s25, 0
      %p163 = por %p161, %p162
      %s164 = ssub.s32 %s26, %s38
      %p165 = scmp.eq.s32.totalorder %s164, 0
      %s167 = sadd.s32 %s166, 1
      %s168 = scalar_select %p165, %s166, %s167
      %p171 = pneg %p165
      %p172 = scmp.eq.s32.totalorder %s19, 1
      %p173 = por %p171, %p172
      %p174 = scmp.ne.s32.totalorder %s166, %s169
      %p175 = scmp.eq.s32.totalorder %s19, 0
      %p176 = por %p174, %p175
      %p177 = scmp.ne.s32.totalorder %s166, %s169
      %p178 = scmp.eq.s32.totalorder %s24, 1
      %p179 = por %p177, %p178
      %p180 = scmp.ne.s32.totalorder %s169, %s170
      %p181 = scmp.eq.s32.totalorder %s24, 0
      %p182 = por %p180, %p181
      %p183 = scmp.ne.s32.totalorder %s169, %s170
      %p184 = scmp.eq.s32.totalorder %s25, 1
      %p185 = por %p183, %p184
      %p187 = scmp.ne.s32.totalorder %s170, %s186
      %p188 = scmp.eq.s32.totalorder %s25, 0
      %p189 = por %p187, %p188
      %p190 = scmp.le.s32.totalorder 1, %s19
      %p191 = scmp.lt.s32.totalorder %s19, 3
      %p192 = pnand %p190, %p191
      %p193 = pneg %p192
      // Predicated region
      $region9: #{tpu_custom_call.1} parent=5 // pred_check
        _
      $region10: #{tpu_custom_call.1} parent=5 // pred_check_branch
        %195 = sbr.rel (%p192) target = $region12
      $region11: #{tpu_custom_call.1} parent=5 // pred_region
        %s196 = ssub.s32 %s19, 1
        // Predicated region
        $region13: #{tpu_custom_call.1} parent=11 // pred_check
          %p197 = pneg %p57
        $region14: #{tpu_custom_call.1} parent=11 // pred_check_branch
          %199 = sbr.rel (%p197) target = $region16
        $region15: #{tpu_custom_call.1} parent=11 // pred_region
          %s200 = smul.u32 13, %s28
          %s202 = ssub.s32 1664, 1664
          %203 = vsyncadd [#allocation4], %s202
          %s204 = smul.addr %s200, 128
          %s205 = scalar_lea.hbm %s0, %s204
          %s206 = sshll.u32 [#allocation3], 4
          %s207 = int_to_ptr.vmem [resolvable:$true] %s206
          %212 = dma.hbm_to_vmem [thread:$0]  %s205, 1664, %s207, [#allocation4], 128, 128, 8
        $region16: #{tpu_custom_call.1} parent=11 // pred_fallthru
          _
        // Predicated region
        $region17: #{tpu_custom_call.1} parent=11 // pred_check
          %p213 = pneg %p156
        $region18: #{tpu_custom_call.1} parent=11 // pred_check_branch
          %215 = sbr.rel (%p213) target = $region20
        $region19: #{tpu_custom_call.1} parent=11 // pred_region
          _
        $region20: #{tpu_custom_call.1} parent=11 // pred_fallthru
          _
      $region12: #{tpu_custom_call.1} parent=5 // pred_fallthru
        _
      %p216 = scmp.lt.s32.totalorder %s19, 2
      // Predicated region
      $region21: #{tpu_custom_call.1} parent=5 // pred_check
        %p217 = pneg %p216
      $region22: #{tpu_custom_call.1} parent=5 // pred_check_branch
        %219 = sbr.rel (%p217) target = $region24
      $region23: #{tpu_custom_call.1} parent=5 // pred_region
        // Predicated region
        $region25: #{tpu_custom_call.1} parent=23 // pred_check
          %p220 = pneg %p77
        $region26: #{tpu_custom_call.1} parent=23 // pred_check_branch
          %222 = sbr.rel (%p220) target = $region28
        $region27: #{tpu_custom_call.1} parent=23 // pred_region
          %s223 = sand.u32 %s19, 1
          %s224 = scalar_lea.sflag [#allocation7], %s223
          %s225 = sand.u32 %s67, 1
          %s226 = smul.addr %s225, 128
          %s227 = scalar_lea.vmem [#allocation6], %s226
          %s228 = smul.u32 2, %s27
          %s230 = ssub.s32 2048, 2048
          %231 = vsyncadd %s224, %s230
          %s232 = smul.addr %s228, 64
          %s233 = scalar_lea.hbm %s1, %s232
          %s234 = sshll.u32 %s227, 4
          %s235 = int_to_ptr.vmem [resolvable:$true] %s234
          %240 = dma.hbm_to_vmem [thread:$0]  %s233, 2048, %s235, %s224, 256, 128, 8
        $region28: #{tpu_custom_call.1} parent=23 // pred_fallthru
          _
        // Predicated region
        $region29: #{tpu_custom_call.1} parent=23 // pred_check
          %p241 = pneg %p103
        $region30: #{tpu_custom_call.1} parent=23 // pred_check_branch
          %243 = sbr.rel (%p241) target = $region32
        $region31: #{tpu_custom_call.1} parent=23 // pred_region
          %s244 = sand.u32 %s19, 1
          %s245 = scalar_lea.sflag [#allocation7], %s244
          %s246 = sand.u32 %s93, 1
          %s247 = smul.addr %s246, 2
          %s248 = scalar_lea.vmem [#allocation8], %s247
          %s249 = smul.u32 2, %s27
          %s251 = ssub.s32 32, 32
          %252 = vsyncadd %s245, %s251
          %s253 = smul.addr %s249, 16
          %s254 = scalar_lea.hbm %s2, %s253
          %s256 = sshll.u32 %s248, 4
          %s257 = int_to_ptr.vmem [resolvable:$true] %s256
          %259 = dma.hbm_to_vmem [thread:$0]  %s254, 32, %s257, %s245
        $region32: #{tpu_custom_call.1} parent=23 // pred_fallthru
          _
        // Predicated region
        $region33: #{tpu_custom_call.1} parent=23 // pred_check
          %p260 = pneg %p129
        $region34: #{tpu_custom_call.1} parent=23 // pred_check_branch
          %262 = sbr.rel (%p260) target = $region36
        $region35: #{tpu_custom_call.1} parent=23 // pred_region
          %s263 = sand.u32 %s119, 1
          %s264 = scalar_lea.sflag [#allocation10], %s263
          %s265 = sand.u32 %s119, 1
          %s266 = smul.addr %s265, 128
          %s267 = scalar_lea.vmem [#allocation9], %s266
          %s268 = smul.u32 32, %s27
          %s270 = ssub.s32 2048, 2048
          %271 = vsyncadd %s264, %s270
          %s272 = smul.addr %s268, 64
          %s273 = scalar_lea.hbm %s3, %s272
          %s274 = sshll.u32 %s267, 4
          %s275 = int_to_ptr.vmem [resolvable:$true] %s274
          %280 = dma.hbm_to_vmem [thread:$0]  %s273, 2048, %s275, %s264, 64, 64, 4
        $region36: #{tpu_custom_call.1} parent=23 // pred_fallthru
          _
      $region24: #{tpu_custom_call.1} parent=5 // pred_fallthru
        _
      %p281 = scmp.le.s32.totalorder 1, %s19
      %p282 = scmp.lt.s32.totalorder %s19, 3
      %p283 = pnand %p281, %p282
      %p284 = pneg %p283
      // Predicated region
      $region37: #{tpu_custom_call.1} parent=5 // pred_check
        _
      $region38: #{tpu_custom_call.1} parent=5 // pred_check_branch
        %286 = sbr.rel (%p283) target = $region40
      $region39: #{tpu_custom_call.1} parent=5 // pred_region
        %s287 = ssub.s32 %s19, 1
        // Predicated region
        $region41: #{tpu_custom_call.1} parent=39 // pred_check
          %p288 = pneg %p57
        $region42: #{tpu_custom_call.1} parent=39 // pred_check_branch
          %290 = sbr.rel (%p288) target = $region44
        $region43: #{tpu_custom_call.1} parent=39 // pred_region
          %291 = dma.done [#allocation4], 1664
        $region44: #{tpu_custom_call.1} parent=39 // pred_fallthru
          _
        %s292 = sand.u32 %s24, 1
        %s293 = scalar_lea.sflag [#allocation7], %s292
        %s294 = sand.u32 %s70, 1
        %s295 = smul.addr %s294, 128
        %s296 = scalar_lea.vmem [#allocation6], %s295
        // Predicated region
        $region45: #{tpu_custom_call.1} parent=39 // pred_check
          %p297 = pneg %p83
        $region46: #{tpu_custom_call.1} parent=39 // pred_check_branch
          %299 = sbr.rel (%p297) target = $region48
        $region47: #{tpu_custom_call.1} parent=39 // pred_region
          %300 = dma.done %s293, 2048
        $region48: #{tpu_custom_call.1} parent=39 // pred_fallthru
          _
        %s301 = sand.u32 %s24, 1
        %s302 = scalar_lea.sflag [#allocation7], %s301
        %s303 = sand.u32 %s96, 1
        %s304 = smul.addr %s303, 2
        %s305 = scalar_lea.vmem [#allocation8], %s304
        // Predicated region
        $region49: #{tpu_custom_call.1} parent=39 // pred_check
          %p306 = pneg %p109
        $region50: #{tpu_custom_call.1} parent=39 // pred_check_branch
          %308 = sbr.rel (%p306) target = $region52
        $region51: #{tpu_custom_call.1} parent=39 // pred_region
          %309 = dma.done %s302, 32
        $region52: #{tpu_custom_call.1} parent=39 // pred_fallthru
          _
        %s310 = sand.u32 %s122, 1
        %s311 = scalar_lea.sflag [#allocation10], %s310
        %s312 = sand.u32 %s122, 1
        %s313 = smul.addr %s312, 128
        %s314 = scalar_lea.vmem [#allocation9], %s313
        // Predicated region
        $region53: #{tpu_custom_call.1} parent=39 // pred_check
          %p315 = pneg %p135
        $region54: #{tpu_custom_call.1} parent=39 // pred_check_branch
          %317 = sbr.rel (%p315) target = $region56
        $region55: #{tpu_custom_call.1} parent=39 // pred_region
          %318 = dma.done %s311, 2048
        $region56: #{tpu_custom_call.1} parent=39 // pred_fallthru
          _
        %p319 = pneg %p57
        %p320 = pneg %p54
        %s321 = sand.u32 %s24, 1
        %s322 = scalar_lea.sflag [#allocation7], %s321
        %s323 = sand.u32 %s70, 1
        %s324 = smul.addr %s323, 128
        %s325 = scalar_lea.vmem [#allocation6], %s324
        %p326 = pneg %p83
        %p327 = pneg %p80
        %s328 = sand.u32 %s24, 1
        %s329 = scalar_lea.sflag [#allocation7], %s328
        %s330 = sand.u32 %s96, 1
        %s331 = smul.addr %s330, 2
        %s332 = scalar_lea.vmem [#allocation8], %s331
        %p333 = pneg %p109
        %p334 = pneg %p106
        %s335 = sand.u32 %s122, 1
        %s336 = scalar_lea.sflag [#allocation10], %s335
        %s337 = sand.u32 %s122, 1
        %s338 = smul.addr %s337, 128
        %s339 = scalar_lea.vmem [#allocation9], %s338
        %p340 = pneg %p135
        %p341 = pneg %p132
        %p342 = pneg %p156
        %p343 = pneg %p153
        %p344 = pneg %p182
        %p345 = pneg %p179
        %s346 = smul.u32 13, %s28
        %s347 = smul.u32 2, %s29
        %s348 = smul.u32 2, %s29
        %s349 = smul.u32 32, %s29
        %s350 = smul.u32 13, %s28
        %p352 = scmp.eq.s32.totalorder %s29, 0
        // Predicated region
        $region57: #{tpu_custom_call.1} parent=39 // pred_check
          %p353 = pneg %p352
        $region58: #{tpu_custom_call.1} parent=39 // pred_check_branch
          %355 = sbr.rel (%p353) target = $region60
        $region59: #{tpu_custom_call.1} parent=39 // pred_region
          %356 = vst [vmem:[#allocation2] sm:$0xff] 0.0
          %357 = vst [vmem:[#allocation2 + $0x8] sm:$0xff] 0.0
          %358 = vst [vmem:[#allocation2 + $0x10] sm:$0xff] 0.0
          %359 = vst [vmem:[#allocation2 + $0x18] sm:$0xff] 0.0
          %360 = vst [vmem:[#allocation2 + $0x20] sm:$0xff] 0.0
          %361 = vst [vmem:[#allocation2 + $0x28] sm:$0xff] 0.0
          %362 = vst [vmem:[#allocation2 + $0x30] sm:$0xff] 0.0
          %363 = vst [vmem:[#allocation2 + $0x38] sm:$0xff] 0.0
          %364 = vst [vmem:[#allocation2 + $0x40] sm:$0xff] 0.0
          %365 = vst [vmem:[#allocation2 + $0x48] sm:$0xff] 0.0
          %366 = vst [vmem:[#allocation2 + $0x50] sm:$0xff] 0.0
          %367 = vst [vmem:[#allocation2 + $0x58] sm:$0xff] 0.0
          %368 = vst [vmem:[#allocation2 + $0x60] sm:$0xff] 0.0
        $region60: #{tpu_custom_call.1} parent=39 // pred_fallthru
          _
        %v369 = vld [vmem:[#allocation3] sm:$0xff]
        %v370 = vld [vmem:[#allocation3 + $0x8] sm:$0xff]
        %v371 = vld [vmem:[#allocation3 + $0x10] sm:$0xff]
        %v372 = vld [vmem:[#allocation3 + $0x18] sm:$0xff]
        %v373 = vld [vmem:[#allocation3 + $0x20] sm:$0xff]
        %v374 = vld [vmem:[#allocation3 + $0x28] sm:$0xff]
        %v375 = vld [vmem:[#allocation3 + $0x30] sm:$0xff]
        %v376 = vld [vmem:[#allocation3 + $0x38] sm:$0xff]
        %v377 = vld [vmem:[#allocation3 + $0x40] sm:$0xff]
        %v378 = vld [vmem:[#allocation3 + $0x48] sm:$0xff]
        %v379 = vld [vmem:[#allocation3 + $0x50] sm:$0xff]
        %v380 = vld [vmem:[#allocation3 + $0x58] sm:$0xff]
        %v381 = vld [vmem:[#allocation3 + $0x60] sm:$0xff]
        %v382 = vpack.c.bf16 %v370, %v369
        %v383 = vpack.c.bf16 %v372, %v371
        %v384 = vpack.c.bf16 %v374, %v373
        %v385 = vpack.c.bf16 %v376, %v375
        %v386 = vpack.c.bf16 %v378, %v377
        %v387 = vpack.c.bf16 %v380, %v379
        %v388 = vpack.c.bf16 %v381, %v381
        %v389 = vld [vmem:[%s296] sm:$0xff]
        %v390 = vld [vmem:[%s296 + $0x8] sm:$0xff]
        %v391 = vld [vmem:[%s296 + $0x10] sm:$0xff]
        %v392 = vld [vmem:[%s296 + $0x18] sm:$0xff]
        %v393 = vld [vmem:[%s296 + $0x20] sm:$0xff]
        %v394 = vld [vmem:[%s296 + $0x28] sm:$0xff]
        %v395 = vld [vmem:[%s296 + $0x30] sm:$0xff]
        %v396 = vld [vmem:[%s296 + $0x38] sm:$0xff]
        %v397 = vld [vmem:[%s296 + $0x40] sm:$0xff]
        %v398 = vld [vmem:[%s296 + $0x48] sm:$0xff]
        %v399 = vld [vmem:[%s296 + $0x50] sm:$0xff]
        %v400 = vld [vmem:[%s296 + $0x58] sm:$0xff]
        %v401 = vld [vmem:[%s296 + $0x60] sm:$0xff]
        %v402 = vld [vmem:[%s296 + $0x68] sm:$0xff]
        %v403 = vld [vmem:[%s296 + $0x70] sm:$0xff]
        %v404 = vld [vmem:[%s296 + $0x78] sm:$0xff]
        %v405 = vld [vmem:[%s305] sm:$0x3]
        %v407 = vlaneseq
        %v408 = vshrl.u32 %v407, 7
        %v409 = vsub.s32 0, %v408
        %v410 = vrot.slane %v405, %v409
        %v411 = vlaneseq
        %v412 = vshrl.u32 %v411, 7
        %v413 = vsub.s32 1, %v412
        %v414 = vrot.slane %v405, %v413
        %v433 = vunpack.c.l.b16 %v389
        %v434 = vunpack.c.h.b16 %v389
        %v435 = vunpack.c.l.b16 %v390
        %v436 = vunpack.c.h.b16 %v390
        %v437 = vunpack.c.l.b16 %v391
        %v438 = vunpack.c.h.b16 %v391
        %v439 = vunpack.c.l.b16 %v392
        %v440 = vunpack.c.h.b16 %v392
        %v441 = vunpack.c.l.b16 %v393
        %v442 = vunpack.c.h.b16 %v393
        %v443 = vunpack.c.l.b16 %v394
        %v444 = vunpack.c.h.b16 %v394
        %v445 = vunpack.c.l.b16 %v395
        %v446 = vunpack.c.h.b16 %v395
        %v447 = vunpack.c.l.b16 %v396
        %v448 = vunpack.c.h.b16 %v396
        %v449 = vunpack.c.l.b16 %v397
        %v450 = vunpack.c.h.b16 %v397
        %v451 = vunpack.c.l.b16 %v398
        %v452 = vunpack.c.h.b16 %v398
        %v453 = vunpack.c.l.b16 %v399
        %v454 = vunpack.c.h.b16 %v399
        %v455 = vunpack.c.l.b16 %v400
        %v456 = vunpack.c.h.b16 %v400
        %v457 = vunpack.c.l.b16 %v401
        %v458 = vunpack.c.h.b16 %v401
        %v459 = vunpack.c.l.b16 %v402
        %v460 = vunpack.c.h.b16 %v402
        %v461 = vunpack.c.l.b16 %v403
        %v462 = vunpack.c.h.b16 %v403
        %v463 = vunpack.c.l.b16 %v404
        %v464 = vunpack.c.h.b16 %v404
        %v465 = vpack.c.b16 %v435, %v433
        %v466 = vpack.c.b16 %v436, %v434
        %v467 = vpack.c.b16 %v439, %v437
        %v468 = vpack.c.b16 %v440, %v438
        %v469 = vpack.c.b16 %v443, %v441
        %v470 = vpack.c.b16 %v444, %v442
        %v471 = vpack.c.b16 %v447, %v445
        %v472 = vpack.c.b16 %v448, %v446
        %v473 = vpack.c.b16 %v451, %v449
        %v474 = vpack.c.b16 %v452, %v450
        %v475 = vpack.c.b16 %v455, %v453
        %v476 = vpack.c.b16 %v456, %v454
        %v477 = vpack.c.b16 %v459, %v457
        %v478 = vpack.c.b16 %v460, %v458
        %v479 = vpack.c.b16 %v463, %v461
        %v480 = vpack.c.b16 %v464, %v462
        %497 = vmatprep.subr.bf16.mxu0 %v480
        %498 = vmatpush1.bf16.msra.mxu0 %v479
        %499 = vmatprep.subr.bf16.mxu0 %v478
        %500 = vmatpush1.bf16.msra.mxu0 %v477
        %501 = vmatprep.subr.bf16.mxu0 %v476
        %502 = vmatpush1.bf16.msra.mxu0 %v475
        %503 = vmatprep.subr.bf16.mxu0 %v474
        %504 = vmatpush1.bf16.msra.mxu0 %v473
        %505 = vmatprep.subr.bf16.mxu0 %v472
        %506 = vmatpush1.bf16.msra.mxu0 %v471
        %507 = vmatprep.subr.bf16.mxu0 %v470
        %508 = vmatpush1.bf16.msra.mxu0 %v469
        %509 = vmatprep.subr.bf16.mxu0 %v468
        %510 = vmatpush1.bf16.msra.mxu0 %v467
        %511 = vmatprep.subr.bf16.mxu0 %v466
        %512 = vmatpush1.bf16.msra.mxu0 %v465
        %513 = vmatprep.subr.bf16.mxu0 0
        %514 = vmatpush2.bf16.msra.mxu0 0
        %515 = vmatprep.subr.bf16.mxu0 0
        %516 = vmatpush2.bf16.msra.mxu0 0
        %517 = vmatprep.subr.bf16.mxu0 0
        %518 = vmatpush2.bf16.msra.mxu0 0
        %519 = vmatprep.subr.bf16.mxu0 0
        %520 = vmatpush2.bf16.msra.mxu0 0
        %521 = vmatprep.subr.bf16.mxu0 0
        %522 = vmatpush2.bf16.msra.mxu0 0
        %523 = vmatprep.subr.bf16.mxu0 0
        %524 = vmatpush2.bf16.msra.mxu0 0
        %525 = vmatprep.subr.bf16.mxu0 0
        %526 = vmatpush2.bf16.msra.mxu0 0
        %527 = vmatprep.subr.bf16.mxu0 0
        %528 = vmatpush2.bf16.msra.mxu0 0
        %529 = vmatprep.mubr.bf16.mxu0 0
        %530 = vmatmul.mubr.bf16.gmra.mxu0 %v382
        %v531 = vpop.f32.mrf.mxu0
        %v532 = vadd.f32 %v410, %v531
        %v533 = vpop.f32.mrf.mxu0
        %v534 = vadd.f32 %v414, %v533
        %v535 = vpop.f32.mrf.mxu0
        %v536 = vadd.f32 %v410, %v535
        %v537 = vpop.f32.mrf.mxu0
        %v538 = vadd.f32 %v414, %v537
        %539 = vmatprep.mubr.bf16.mxu0 0
        %540 = vmatmul.mubr.bf16.gmra.mxu0 %v383
        %v541 = vpop.f32.mrf.mxu0
        %v542 = vadd.f32 %v410, %v541
        %v543 = vpop.f32.mrf.mxu0
        %v544 = vadd.f32 %v414, %v543
        %v545 = vpop.f32.mrf.mxu0
        %v546 = vadd.f32 %v410, %v545
        %v547 = vpop.f32.mrf.mxu0
        %v548 = vadd.f32 %v414, %v547
        %549 = vmatprep.mubr.bf16.mxu0 0
        %550 = vmatmul.mubr.bf16.gmra.mxu0 %v384
        %v551 = vpop.f32.mrf.mxu0
        %v552 = vadd.f32 %v410, %v551
        %v553 = vpop.f32.mrf.mxu0
        %v554 = vadd.f32 %v414, %v553
        %v555 = vpop.f32.mrf.mxu0
        %v556 = vadd.f32 %v410, %v555
        %v557 = vpop.f32.mrf.mxu0
        %v558 = vadd.f32 %v414, %v557
        %559 = vmatprep.mubr.bf16.mxu0 0
        %560 = vmatmul.mubr.bf16.gmra.mxu0 %v385
        %v561 = vpop.f32.mrf.mxu0
        %v562 = vadd.f32 %v410, %v561
        %v563 = vpop.f32.mrf.mxu0
        %v564 = vadd.f32 %v414, %v563
        %v565 = vpop.f32.mrf.mxu0
        %v566 = vadd.f32 %v410, %v565
        %v567 = vpop.f32.mrf.mxu0
        %v568 = vadd.f32 %v414, %v567
        %569 = vmatprep.mubr.bf16.mxu0 0
        %570 = vmatmul.mubr.bf16.gmra.mxu0 %v386
        %v571 = vpop.f32.mrf.mxu0
        %v572 = vadd.f32 %v410, %v571
        %v573 = vpop.f32.mrf.mxu0
        %v574 = vadd.f32 %v414, %v573
        %v575 = vpop.f32.mrf.mxu0
        %v576 = vadd.f32 %v410, %v575
        %v577 = vpop.f32.mrf.mxu0
        %v578 = vadd.f32 %v414, %v577
        %579 = vmatprep.mubr.bf16.mxu0 0
        %580 = vmatmul.mubr.bf16.gmra.mxu0 %v387
        %v581 = vpop.f32.mrf.mxu0
        %v582 = vadd.f32 %v410, %v581
        %v583 = vpop.f32.mrf.mxu0
        %v584 = vadd.f32 %v414, %v583
        %v585 = vpop.f32.mrf.mxu0
        %v586 = vadd.f32 %v410, %v585
        %v587 = vpop.f32.mrf.mxu0
        %v588 = vadd.f32 %v414, %v587
        %589 = vmatprep.mubr.bf16.mxu0 0
        %590 = vmatmul.mubr.bf16.gmra.mxu0 %v388
        %v591 = vpop.f32.mrf.mxu0
        %v592 = vadd.f32 %v410, %v591
        %v593 = vpop.f32.mrf.mxu0
        %v594 = vadd.f32 %v414, %v593
        %v595 = vpop.f32.mrf.mxu0
        %v596 = vpop.f32.mrf.mxu0
        %597 = vdwg.mxu0
        %v598 = vmul.f32 %v532, 0.5
        %v599 = vmul.f32 %v534, 0.5
        %v600 = vmul.f32 %v536, 0.5
        %v601 = vmul.f32 %v538, 0.5
        %v602 = vmul.f32 %v542, 0.5
        %v603 = vmul.f32 %v544, 0.5
        %v604 = vmul.f32 %v546, 0.5
        %v605 = vmul.f32 %v548, 0.5
        %v606 = vmul.f32 %v552, 0.5
        %v607 = vmul.f32 %v554, 0.5
        %v608 = vmul.f32 %v556, 0.5
        %v609 = vmul.f32 %v558, 0.5
        %v610 = vmul.f32 %v562, 0.5
        %v611 = vmul.f32 %v564, 0.5
        %v612 = vmul.f32 %v566, 0.5
        %v613 = vmul.f32 %v568, 0.5
        %v614 = vmul.f32 %v572, 0.5
        %v615 = vmul.f32 %v574, 0.5
        %v616 = vmul.f32 %v576, 0.5
        %v617 = vmul.f32 %v578, 0.5
        %v618 = vmul.f32 %v582, 0.5
        %v619 = vmul.f32 %v584, 0.5
        %v620 = vmul.f32 %v586, 0.5
        %v621 = vmul.f32 %v588, 0.5
        %v622 = vmul.f32 %v592, 0.5
        %v623 = vmul.f32 %v594, 0.5
        %v624 = vmul.f32 %v532, 0.70710677
        %v625 = vmul.f32 %v534, 0.70710677
        %v626 = vmul.f32 %v536, 0.70710677
        %v627 = vmul.f32 %v538, 0.70710677
        %v628 = vmul.f32 %v542, 0.70710677
        %v629 = vmul.f32 %v544, 0.70710677
        %v630 = vmul.f32 %v546, 0.70710677
        %v631 = vmul.f32 %v548, 0.70710677
        %v632 = vmul.f32 %v552, 0.70710677
        %v633 = vmul.f32 %v554, 0.70710677
        %v634 = vmul.f32 %v556, 0.70710677
        %v635 = vmul.f32 %v558, 0.70710677
        %v636 = vmul.f32 %v562, 0.70710677
        %v637 = vmul.f32 %v564, 0.70710677
        %v638 = vmul.f32 %v566, 0.70710677
        %v639 = vmul.f32 %v568, 0.70710677
        %v640 = vmul.f32 %v572, 0.70710677
        %v641 = vmul.f32 %v574, 0.70710677
        %v642 = vmul.f32 %v576, 0.70710677
        %v643 = vmul.f32 %v578, 0.70710677
        %v644 = vmul.f32 %v582, 0.70710677
        %v645 = vmul.f32 %v584, 0.70710677
        %v646 = vmul.f32 %v586, 0.70710677
        %v647 = vmul.f32 %v588, 0.70710677
        %v648 = vmul.f32 %v592, 0.70710677
        %v649 = vmul.f32 %v594, 0.70710677
        %v650 = verf.f32.pop %v624
        %v651 = verf.f32.pop %v625
        %v652 = verf.f32.pop %v626
        %v653 = verf.f32.pop %v627
        %v654 = verf.f32.pop %v628
        %v655 = verf.f32.pop %v629
        %v656 = verf.f32.pop %v630
        %v657 = verf.f32.pop %v631
        %v658 = verf.f32.pop %v632
        %v659 = verf.f32.pop %v633
        %v660 = verf.f32.pop %v634
        %v661 = verf.f32.pop %v635
        %v662 = verf.f32.pop %v636
        %v663 = verf.f32.pop %v637
        %v664 = verf.f32.pop %v638
        %v665 = verf.f32.pop %v639
        %v666 = verf.f32.pop %v640
        %v667 = verf.f32.pop %v641
        %v668 = verf.f32.pop %v642
        %v669 = verf.f32.pop %v643
        %v670 = verf.f32.pop %v644
        %v671 = verf.f32.pop %v645
        %v672 = verf.f32.pop %v646
        %v673 = verf.f32.pop %v647
        %v674 = verf.f32.pop %v648
        %v675 = verf.f32.pop %v649
        %v676 = vadd.f32 %v650, 1.0
        %v677 = vadd.f32 %v651, 1.0
        %v678 = vadd.f32 %v652, 1.0
        %v679 = vadd.f32 %v653, 1.0
        %v680 = vadd.f32 %v654, 1.0
        %v681 = vadd.f32 %v655, 1.0
        %v682 = vadd.f32 %v656, 1.0
        %v683 = vadd.f32 %v657, 1.0
        %v684 = vadd.f32 %v658, 1.0
        %v685 = vadd.f32 %v659, 1.0
        %v686 = vadd.f32 %v660, 1.0
        %v687 = vadd.f32 %v661, 1.0
        %v688 = vadd.f32 %v662, 1.0
        %v689 = vadd.f32 %v663, 1.0
        %v690 = vadd.f32 %v664, 1.0
        %v691 = vadd.f32 %v665, 1.0
        %v692 = vadd.f32 %v666, 1.0
        %v693 = vadd.f32 %v667, 1.0
        %v694 = vadd.f32 %v668, 1.0
        %v695 = vadd.f32 %v669, 1.0
        %v696 = vadd.f32 %v670, 1.0
        %v697 = vadd.f32 %v671, 1.0
        %v698 = vadd.f32 %v672, 1.0
        %v699 = vadd.f32 %v673, 1.0
        %v700 = vadd.f32 %v674, 1.0
        %v701 = vadd.f32 %v675, 1.0
        %v702 = vmul.f32 %v598, %v676
        %v703 = vmul.f32 %v599, %v677
        %v704 = vmul.f32 %v600, %v678
        %v705 = vmul.f32 %v601, %v679
        %v706 = vmul.f32 %v602, %v680
        %v707 = vmul.f32 %v603, %v681
        %v708 = vmul.f32 %v604, %v682
        %v709 = vmul.f32 %v605, %v683
        %v710 = vmul.f32 %v606, %v684
        %v711 = vmul.f32 %v607, %v685
        %v712 = vmul.f32 %v608, %v686
        %v713 = vmul.f32 %v609, %v687
        %v714 = vmul.f32 %v610, %v688
        %v715 = vmul.f32 %v611, %v689
        %v716 = vmul.f32 %v612, %v690
        %v717 = vmul.f32 %v613, %v691
        %v718 = vmul.f32 %v614, %v692
        %v719 = vmul.f32 %v615, %v693
        %v720 = vmul.f32 %v616, %v694
        %v721 = vmul.f32 %v617, %v695
        %v722 = vmul.f32 %v618, %v696
        %v723 = vmul.f32 %v619, %v697
        %v724 = vmul.f32 %v620, %v698
        %v725 = vmul.f32 %v621, %v699
        %v726 = vmul.f32 %v622, %v700
        %v727 = vmul.f32 %v623, %v701
        %v728 = vld [vmem:[#allocation2] sm:$0xff]
        %v729 = vld [vmem:[#allocation2 + $0x8] sm:$0xff]
        %v730 = vld [vmem:[#allocation2 + $0x10] sm:$0xff]
        %v731 = vld [vmem:[#allocation2 + $0x18] sm:$0xff]
        %v732 = vld [vmem:[#allocation2 + $0x20] sm:$0xff]
        %v733 = vld [vmem:[#allocation2 + $0x28] sm:$0xff]
        %v734 = vld [vmem:[#allocation2 + $0x30] sm:$0xff]
        %v735 = vld [vmem:[#allocation2 + $0x38] sm:$0xff]
        %v736 = vld [vmem:[#allocation2 + $0x40] sm:$0xff]
        %v737 = vld [vmem:[#allocation2 + $0x48] sm:$0xff]
        %v738 = vld [vmem:[#allocation2 + $0x50] sm:$0xff]
        %v739 = vld [vmem:[#allocation2 + $0x58] sm:$0xff]
        %v740 = vld [vmem:[#allocation2 + $0x60] sm:$0xff]
        %v741 = vpack.c.bf16 %v704, %v702
        %v742 = vpack.c.bf16 %v705, %v703
        %v743 = vpack.c.bf16 %v708, %v706
        %v744 = vpack.c.bf16 %v709, %v707
        %v745 = vpack.c.bf16 %v712, %v710
        %v746 = vpack.c.bf16 %v713, %v711
        %v747 = vpack.c.bf16 %v716, %v714
        %v748 = vpack.c.bf16 %v717, %v715
        %v749 = vpack.c.bf16 %v720, %v718
        %v750 = vpack.c.bf16 %v721, %v719
        %v751 = vpack.c.bf16 %v724, %v722
        %v752 = vpack.c.bf16 %v725, %v723
        %v753 = vpack.c.bf16 %v726, %v726
        %v754 = vpack.c.bf16 %v727, %v727
        %v755 = vld [vmem:[%s314] sm:$0xf]
        %v756 = vld [vmem:[%s314 + $0x4] sm:$0xf]
        %v757 = vld [vmem:[%s314 + $0x8] sm:$0xf]
        %v758 = vld [vmem:[%s314 + $0xc] sm:$0xf]
        %v759 = vld [vmem:[%s314 + $0x10] sm:$0xf]
        %v760 = vld [vmem:[%s314 + $0x14] sm:$0xf]
        %v761 = vld [vmem:[%s314 + $0x18] sm:$0xf]
        %v762 = vld [vmem:[%s314 + $0x1c] sm:$0xf]
        %v763 = vld [vmem:[%s314 + $0x20] sm:$0xf]
        %v764 = vld [vmem:[%s314 + $0x24] sm:$0xf]
        %v765 = vld [vmem:[%s314 + $0x28] sm:$0xf]
        %v766 = vld [vmem:[%s314 + $0x2c] sm:$0xf]
        %v767 = vld [vmem:[%s314 + $0x30] sm:$0xf]
        %v768 = vld [vmem:[%s314 + $0x34] sm:$0xf]
        %v769 = vld [vmem:[%s314 + $0x38] sm:$0xf]
        %v770 = vld [vmem:[%s314 + $0x3c] sm:$0xf]
        %v771 = vld [vmem:[%s314 + $0x40] sm:$0xf]
        %v772 = vld [vmem:[%s314 + $0x44] sm:$0xf]
        %v773 = vld [vmem:[%s314 + $0x48] sm:$0xf]
        %v774 = vld [vmem:[%s314 + $0x4c] sm:$0xf]
        %v775 = vld [vmem:[%s314 + $0x50] sm:$0xf]
        %v776 = vld [vmem:[%s314 + $0x54] sm:$0xf]
        %v777 = vld [vmem:[%s314 + $0x58] sm:$0xf]
        %v778 = vld [vmem:[%s314 + $0x5c] sm:$0xf]
        %v779 = vld [vmem:[%s314 + $0x60] sm:$0xf]
        %v780 = vld [vmem:[%s314 + $0x64] sm:$0xf]
        %v781 = vld [vmem:[%s314 + $0x68] sm:$0xf]
        %v782 = vld [vmem:[%s314 + $0x6c] sm:$0xf]
        %v783 = vld [vmem:[%s314 + $0x70] sm:$0xf]
        %v784 = vld [vmem:[%s314 + $0x74] sm:$0xf]
        %v785 = vld [vmem:[%s314 + $0x78] sm:$0xf]
        %v786 = vld [vmem:[%s314 + $0x7c] sm:$0xf]
        %v819 = vunpack.c.l.b16 %v755
        %v820 = vunpack.c.l.b16 %v756
        %v821 = vunpack.c.l.b16 %v757
        %v822 = vunpack.c.l.b16 %v758
        %v823 = vunpack.c.l.b16 %v759
        %v824 = vunpack.c.l.b16 %v760
        %v825 = vunpack.c.l.b16 %v761
        %v826 = vunpack.c.l.b16 %v762
        %v827 = vunpack.c.l.b16 %v763
        %v828 = vunpack.c.l.b16 %v764
        %v829 = vunpack.c.l.b16 %v765
        %v830 = vunpack.c.l.b16 %v766
        %v831 = vunpack.c.l.b16 %v767
        %v832 = vunpack.c.l.b16 %v768
        %v833 = vunpack.c.l.b16 %v769
        %v834 = vunpack.c.l.b16 %v770
        %v835 = vunpack.c.l.b16 %v771
        %v836 = vunpack.c.l.b16 %v772
        %v837 = vunpack.c.l.b16 %v773
        %v838 = vunpack.c.l.b16 %v774
        %v839 = vunpack.c.l.b16 %v775
        %v840 = vunpack.c.l.b16 %v776
        %v841 = vunpack.c.l.b16 %v777
        %v842 = vunpack.c.l.b16 %v778
        %v843 = vunpack.c.l.b16 %v779
        %v844 = vunpack.c.l.b16 %v780
        %v845 = vunpack.c.l.b16 %v781
        %v846 = vunpack.c.l.b16 %v782
        %v847 = vunpack.c.l.b16 %v783
        %v848 = vunpack.c.l.b16 %v784
        %v849 = vunpack.c.l.b16 %v785
        %v850 = vunpack.c.l.b16 %v786
        %v851 = vpack.c.b16 %v820, %v819
        %v852 = vpack.c.b16 %v822, %v821
        %v853 = vpack.c.b16 %v824, %v823
        %v854 = vpack.c.b16 %v826, %v825
        %v855 = vpack.c.b16 %v828, %v827
        %v856 = vpack.c.b16 %v830, %v829
        %v857 = vpack.c.b16 %v832, %v831
        %v858 = vpack.c.b16 %v834, %v833
        %v859 = vpack.c.b16 %v836, %v835
        %v860 = vpack.c.b16 %v838, %v837
        %v861 = vpack.c.b16 %v840, %v839
        %v862 = vpack.c.b16 %v842, %v841
        %v863 = vpack.c.b16 %v844, %v843
        %v864 = vpack.c.b16 %v846, %v845
        %v865 = vpack.c.b16 %v848, %v847
        %v866 = vpack.c.b16 %v850, %v849
        %883 = vmatprep.subr.bf16.mxu0 0
        %884 = vmatpush1.bf16.msra.mxu0 %v858
        %885 = vmatprep.subr.bf16.mxu0 0
        %886 = vmatpush1.bf16.msra.mxu0 %v857
        %887 = vmatprep.subr.bf16.mxu0 0
        %888 = vmatpush1.bf16.msra.mxu0 %v856
        %889 = vmatprep.subr.bf16.mxu0 0
        %890 = vmatpush1.bf16.msra.mxu0 %v855
        %891 = vmatprep.subr.bf16.mxu0 0
        %892 = vmatpush1.bf16.msra.mxu0 %v854
        %893 = vmatprep.subr.bf16.mxu0 0
        %894 = vmatpush1.bf16.msra.mxu0 %v853
        %895 = vmatprep.subr.bf16.mxu0 0
        %896 = vmatpush1.bf16.msra.mxu0 %v852
        %897 = vmatprep.subr.bf16.mxu0 0
        %898 = vmatpush1.bf16.msra.mxu0 %v851
        %899 = vmatprep.subr.bf16.mxu0 0
        %900 = vmatpush2.bf16.msra.mxu0 %v866
        %901 = vmatprep.subr.bf16.mxu0 0
        %902 = vmatpush2.bf16.msra.mxu0 %v865
        %903 = vmatprep.subr.bf16.mxu0 0
        %904 = vmatpush2.bf16.msra.mxu0 %v864
        %905 = vmatprep.subr.bf16.mxu0 0
        %906 = vmatpush2.bf16.msra.mxu0 %v863
        %907 = vmatprep.subr.bf16.mxu0 0
        %908 = vmatpush2.bf16.msra.mxu0 %v862
        %909 = vmatprep.subr.bf16.mxu0 0
        %910 = vmatpush2.bf16.msra.mxu0 %v861
        %911 = vmatprep.subr.bf16.mxu0 0
        %912 = vmatpush2.bf16.msra.mxu0 %v860
        %913 = vmatprep.subr.bf16.mxu0 0
        %914 = vmatpush2.bf16.msra.mxu0 %v859
        %915 = vmatprep.mubr.bf16.mxu0 %v742
        %916 = vmatmul.mubr.bf16.gmra.mxu0 %v741
        %v917 = vpop.f32.mrf.mxu0
        %v918 = vadd.f32 0.0, %v917
        %v919 = vpop.f32.mrf.mxu0
        %v920 = vpop.f32.mrf.mxu0
        %v921 = vadd.f32 0.0, %v920
        %v922 = vpop.f32.mrf.mxu0
        %923 = vmatprep.mubr.bf16.mxu0 %v744
        %924 = vmatmul.mubr.bf16.gmra.mxu0 %v743
        %v925 = vpop.f32.mrf.mxu0
        %v926 = vadd.f32 0.0, %v925
        %v927 = vpop.f32.mrf.mxu0
        %v928 = vpop.f32.mrf.mxu0
        %v929 = vadd.f32 0.0, %v928
        %v930 = vpop.f32.mrf.mxu0
        %931 = vmatprep.mubr.bf16.mxu0 %v746
        %932 = vmatmul.mubr.bf16.gmra.mxu0 %v745
        %v933 = vpop.f32.mrf.mxu0
        %v934 = vadd.f32 0.0, %v933
        %v935 = vpop.f32.mrf.mxu0
        %v936 = vpop.f32.mrf.mxu0
        %v937 = vadd.f32 0.0, %v936
        %v938 = vpop.f32.mrf.mxu0
        %939 = vmatprep.mubr.bf16.mxu0 %v748
        %940 = vmatmul.mubr.bf16.gmra.mxu0 %v747
        %v941 = vpop.f32.mrf.mxu0
        %v942 = vadd.f32 0.0, %v941
        %v943 = vpop.f32.mrf.mxu0
        %v944 = vpop.f32.mrf.mxu0
        %v945 = vadd.f32 0.0, %v944
        %v946 = vpop.f32.mrf.mxu0
        %947 = vmatprep.mubr.bf16.mxu0 %v750
        %948 = vmatmul.mubr.bf16.gmra.mxu0 %v749
        %v949 = vpop.f32.mrf.mxu0
        %v950 = vadd.f32 0.0, %v949
        %v951 = vpop.f32.mrf.mxu0
        %v952 = vpop.f32.mrf.mxu0
        %v953 = vadd.f32 0.0, %v952
        %v954 = vpop.f32.mrf.mxu0
        %955 = vmatprep.mubr.bf16.mxu0 %v752
        %956 = vmatmul.mubr.bf16.gmra.mxu0 %v751
        %v957 = vpop.f32.mrf.mxu0
        %v958 = vadd.f32 0.0, %v957
        %v959 = vpop.f32.mrf.mxu0
        %v960 = vpop.f32.mrf.mxu0
        %v961 = vadd.f32 0.0, %v960
        %v962 = vpop.f32.mrf.mxu0
        %963 = vmatprep.mubr.bf16.mxu0 %v754
        %964 = vmatmul.mubr.bf16.gmra.mxu0 %v753
        %v965 = vpop.f32.mrf.mxu0
        %v966 = vadd.f32 0.0, %v965
        %v967 = vpop.f32.mrf.mxu0
        %v968 = vpop.f32.mrf.mxu0
        %v969 = vpop.f32.mrf.mxu0
        %970 = vdwg.mxu0
        %v971 = vadd.f32 %v728, %v918
        %v972 = vadd.f32 %v729, %v921
        %v973 = vadd.f32 %v730, %v926
        %v974 = vadd.f32 %v731, %v929
        %v975 = vadd.f32 %v732, %v934
        %v976 = vadd.f32 %v733, %v937
        %v977 = vadd.f32 %v734, %v942
        %v978 = vadd.f32 %v735, %v945
        %v979 = vadd.f32 %v736, %v950
        %v980 = vadd.f32 %v737, %v953
        %v981 = vadd.f32 %v738, %v958
        %v982 = vadd.f32 %v739, %v961
        %v983 = vadd.f32 %v740, %v966
        %984 = vst [vmem:[#allocation2] sm:$0xff] %v971
        %985 = vst [vmem:[#allocation2 + $0x8] sm:$0xff] %v972
        %986 = vst [vmem:[#allocation2 + $0x10] sm:$0xff] %v973
        %987 = vst [vmem:[#allocation2 + $0x18] sm:$0xff] %v974
        %988 = vst [vmem:[#allocation2 + $0x20] sm:$0xff] %v975
        %989 = vst [vmem:[#allocation2 + $0x28] sm:$0xff] %v976
        %990 = vst [vmem:[#allocation2 + $0x30] sm:$0xff] %v977
        %991 = vst [vmem:[#allocation2 + $0x38] sm:$0xff] %v978
        %992 = vst [vmem:[#allocation2 + $0x40] sm:$0xff] %v979
        %993 = vst [vmem:[#allocation2 + $0x48] sm:$0xff] %v980
        %994 = vst [vmem:[#allocation2 + $0x50] sm:$0xff] %v981
        %995 = vst [vmem:[#allocation2 + $0x58] sm:$0xff] %v982
        %996 = vst [vmem:[#allocation2 + $0x60] sm:$0xff] %v983
        %p997 = scmp.eq.s32.totalorder %s29, 1
        // Predicated region
        $region61: #{tpu_custom_call.1} parent=39 // pred_check
          %p998 = pneg %p997
        $region62: #{tpu_custom_call.1} parent=39 // pred_check_branch
          %1000 = sbr.rel (%p998) target = $region64
        $region63: #{tpu_custom_call.1} parent=39 // pred_region
          %v1001 = vld [vmem:[#allocation2] sm:$0xff]
          %v1002 = vld [vmem:[#allocation2 + $0x8] sm:$0xff]
          %v1003 = vld [vmem:[#allocation2 + $0x10] sm:$0xff]
          %v1004 = vld [vmem:[#allocation2 + $0x18] sm:$0xff]
          %v1005 = vld [vmem:[#allocation2 + $0x20] sm:$0xff]
          %v1006 = vld [vmem:[#allocation2 + $0x28] sm:$0xff]
          %v1007 = vld [vmem:[#allocation2 + $0x30] sm:$0xff]
          %v1008 = vld [vmem:[#allocation2 + $0x38] sm:$0xff]
          %v1009 = vld [vmem:[#allocation2 + $0x40] sm:$0xff]
          %v1010 = vld [vmem:[#allocation2 + $0x48] sm:$0xff]
          %v1011 = vld [vmem:[#allocation2 + $0x50] sm:$0xff]
          %v1012 = vld [vmem:[#allocation2 + $0x58] sm:$0xff]
          %v1013 = vld [vmem:[#allocation2 + $0x60] sm:$0xff]
          %v1014 = vld [vmem:[%s4] sm:$0x1]
          %v1016 = vlaneseq
          %v1017 = vshrl.u32 %v1016, 7
          %v1018 = vsub.s32 0, %v1017
          %v1019 = vrot.slane %v1014, %v1018
          %v1021 = vadd.f32 %v1001, %v1019
          %v1022 = vadd.f32 %v1002, %v1019
          %v1023 = vadd.f32 %v1003, %v1019
          %v1024 = vadd.f32 %v1004, %v1019
          %v1025 = vadd.f32 %v1005, %v1019
          %v1026 = vadd.f32 %v1006, %v1019
          %v1027 = vadd.f32 %v1007, %v1019
          %v1028 = vadd.f32 %v1008, %v1019
          %v1029 = vadd.f32 %v1009, %v1019
          %v1030 = vadd.f32 %v1010, %v1019
          %v1031 = vadd.f32 %v1011, %v1019
          %v1032 = vadd.f32 %v1012, %v1019
          %v1033 = vadd.f32 %v1013, %v1019
          %1034 = vst [vmem:[#allocation11] sm:$0xff] %v1021
          %1035 = vst [vmem:[#allocation11 + $0x8] sm:$0xff] %v1022
          %1036 = vst [vmem:[#allocation11 + $0x10] sm:$0xff] %v1023
          %1037 = vst [vmem:[#allocation11 + $0x18] sm:$0xff] %v1024
          %1038 = vst [vmem:[#allocation11 + $0x20] sm:$0xff] %v1025
          %1039 = vst [vmem:[#allocation11 + $0x28] sm:$0xff] %v1026
          %1040 = vst [vmem:[#allocation11 + $0x30] sm:$0xff] %v1027
          %1041 = vst [vmem:[#allocation11 + $0x38] sm:$0xff] %v1028
          %1042 = vst [vmem:[#allocation11 + $0x40] sm:$0xff] %v1029
          %1043 = vst [vmem:[#allocation11 + $0x48] sm:$0xff] %v1030
          %1044 = vst [vmem:[#allocation11 + $0x50] sm:$0xff] %v1031
          %1045 = vst [vmem:[#allocation11 + $0x58] sm:$0xff] %v1032
          %1046 = vst [vmem:[#allocation11 + $0x60] sm:$0xff] %v1033
        $region64: #{tpu_custom_call.1} parent=39 // pred_fallthru
          _
        // Predicated region
        $region65: #{tpu_custom_call.1} parent=39 // pred_check
          %p1047 = pneg %p179
        $region66: #{tpu_custom_call.1} parent=39 // pred_check_branch
          %1049 = sbr.rel (%p1047) target = $region68
        $region67: #{tpu_custom_call.1} parent=39 // pred_region
          %s1050 = smul.u32 13, %s28
          %s1052 = ssub.s32 1664, 1664
          %1053 = vsyncadd [#allocation5], %s1052
          %s1054 = smul.addr %s1050, 128
          %s1055 = scalar_lea.hbm %s5, %s1054
          %s1056 = sshll.u32 [#allocation11], 4
          %s1057 = int_to_ptr.vmem [resolvable:$true] %s1056
          %1062 = dma.vmem_to_hbm [thread:$0]  %s1057, 1664, %s1055, [#allocation5], 128, 128, 8
        $region68: #{tpu_custom_call.1} parent=39 // pred_fallthru
          _
        // Predicated region
        $region69: #{tpu_custom_call.1} parent=39 // pred_check
          %p1063 = pneg %p179
        $region70: #{tpu_custom_call.1} parent=39 // pred_check_branch
          %1065 = sbr.rel (%p1063) target = $region72
        $region71: #{tpu_custom_call.1} parent=39 // pred_region
          %1066 = dma.done [#allocation5], 1664
        $region72: #{tpu_custom_call.1} parent=39 // pred_fallthru
          _
      $region40: #{tpu_custom_call.1} parent=5 // pred_fallthru
        _
      %p1067 = scmp.le.s32.totalorder 2, %s19
      // Predicated region
      $region73: #{tpu_custom_call.1} parent=5 // pred_check
        %p1068 = pneg %p1067
      $region74: #{tpu_custom_call.1} parent=5 // pred_check_branch
        %1070 = sbr.rel (%p1068) target = $region76
      $region75: #{tpu_custom_call.1} parent=5 // pred_region
        %s1071 = ssub.s32 %s19, 2
      $region76: #{tpu_custom_call.1} parent=5 // pred_fallthru
        _
    $region6: #{tpu_custom_call.1} parent=1 // loop_footer
      %s23 = sadd.s32 1, %s19
    $region7: #{tpu_custom_call.1} parent=1 // loop_footer_branch
      %18 = sbr.rel target = $region3
    $region8: #{tpu_custom_call.1} parent=1 // loop_exit
      _
    %1072 = vsyncpa [#allocation4], 1
    %s1073 = scalar_lea.sflag [#allocation4], 1
    %1074 = vsyncpa %s1073, 1
    %1075 = vsyncpa [#allocation7], 1
    %s1076 = scalar_lea.sflag [#allocation7], 1
    %1077 = vsyncpa %s1076, 1
    %1078 = vsyncpa [#allocation10], 1
    %s1079 = scalar_lea.sflag [#allocation10], 1
    %1080 = vsyncpa %s1079, 1
    %1081 = vsyncpa [#allocation5], 1
    %s1082 = scalar_lea.sflag [#allocation5], 1
    %1083 = vsyncpa %s1082, 1

</llo_original>
